<compile_context>
chip_gen: v6e
topology: v6e:2x2x1
jax: 0.10.0
libtpu: 0.0.40
codegen_flags: <defaults>
</compile_context>

<pallas_src>
import functools
from typing import NamedTuple

import jax
import jax.numpy as jnp
from jax.experimental import pallas as pl
from jax.experimental.pallas import tpu as pltpu

_LANE = 128
_MXU_ALIGN = 256          # v6e/v7x MXU is 2x256^2; 256-padding is harmless on v5e.


def _round_up(x, m):
    return (x + m - 1) // m * m


def _hw_config():
    """Generation-aware defaults.

    v5e/v6e (128 MiB VMEM): ~100 MiB scoped limit, tk=1024, single TensorCore.
    v7x     ( 64 MiB VMEM): <=48 MiB scoped limit, tk=512, 2 TensorCores (want >=2
                            parallel batch tiles when the batch allows).
    """
    vmem_cap = None
    try:
        vmem_cap = int(pltpu.get_tpu_info().vmem_capacity_bytes)
    except Exception:
        vmem_cap = None
    if vmem_cap is None:
        vmem_cap = 64 * 1024 * 1024                      # conservative (v7x-sized) fallback
    if vmem_cap >= 100 * 1024 * 1024:                    # v5e / v6e (128 MiB VMEM)
        return {"vmem_limit": 100 * 1024 * 1024, "tm": 512, "tk": 1024, "two_tc": False}
    return {"vmem_limit": 48 * 1024 * 1024, "tm": 512, "tk": 512, "two_tc": True}


_HW = _hw_config()


class RotNetMeta(NamedTuple):
    in_dim: int          # D (original, unpadded)
    in_dim_pad: int      # D_pad (multiple of tk)
    tk: int              # K tile size used by the kernel
    feature_pad: int     # F_pad (MXU-aligned)
    head_pad: int        # N_pad (>= num_classes + 4, lane-aligned)
    num_classes: int
    compute_dtype: type


def _rotnet_kernel(x_ref, wb_ref, bb_ref, wh_ref, bh_ref, out_ref, acc_ref):
    """Grid = (batch tiles [parallel], K tiles [arbitrary]).  Accumulate the backbone
    feature over K in an f32 VMEM scratch; on the last K step apply bias+ReLU and run
    the fused (fc ++ rot_fc) head into a lane-dense 128-wide output slab."""
    k = pl.program_id(1)

    @pl.when(k == 0)
    def _init():
        acc_ref[...] = jnp.zeros_like(acc_ref)

    # Backbone partial matmul for this K slab (MXU, f32 accumulation).
    acc_ref[...] += jnp.dot(x_ref[...], wb_ref[...],
                            preferred_element_type=jnp.float32)

    @pl.when(k == pl.num_programs(1) - 1)
    def _finalize():
        feat = jnp.maximum(acc_ref[...] + bb_ref[...], 0.0)        # [tm, F_pad]
        head = jnp.dot(feat.astype(wh_ref.dtype), wh_ref[...],     # fused heads
                       preferred_element_type=jnp.float32)         # [tm, N_pad]
        out_ref[...] = (head + bh_ref[...]).astype(out_ref.dtype)


def prepare_rotnet_params(params, *, compute_dtype=jnp.bfloat16, tk=None):
    """One-time weight preprocessing (pad, cast, fuse fc ++ rot_fc).

    Hoisted out of the per-call forward: for a realistic backbone (D ~ 150K, F = 2048)
    w_backbone is >1 GB and must not be re-padded / re-cast on every forward."""
    if tk is None:
        tk = _HW["tk"]
    D, F = params["w_backbone"].shape
    num_classes = params["w_fc"].shape[1]
    N = num_classes + 4

    tk_eff = min(tk, _round_up(D, _LANE))
    D_pad = _round_up(D, tk_eff)
    F_pad = _round_up(F, _MXU_ALIGN)      # 256-aligned MXU N dim for the backbone matmul
    N_pad = _round_up(N, _LANE)           # lane-dense fused-head output (full vst)

    wb = jnp.zeros((D_pad, F_pad), compute_dtype).at[:D, :F].set(
        params["w_backbone"].astype(compute_dtype))
    bb = jnp.zeros((1, F_pad), jnp.float32).at[:, :F].set(
        params["b_backbone"].astype(jnp.float32))
    w_head = jnp.concatenate([params["w_fc"], params["w_rot"]], axis=1)   # [F, N]
    b_head = jnp.concatenate([params["b_fc"], params["b_rot"]], axis=1)   # [1, N]
    wh = jnp.zeros((F_pad, N_pad), compute_dtype).at[:F, :N].set(
        w_head.astype(compute_dtype))
    bh = jnp.zeros((1, N_pad), jnp.float32).at[:, :N].set(
        b_head.astype(jnp.float32))

    weights = {"wb": wb, "bb": bb, "wh": wh, "bh": bh}
    meta = RotNetMeta(D, D_pad, tk_eff, F_pad, N_pad, num_classes, compute_dtype)
    return weights, meta


@functools.partial(jax.jit, static_argnames=("meta", "return_rot_logits", "tm"))
def rotnet_forward(x_nchw, weights, meta, return_rot_logits=False, tm=None):
    """x_nchw: [B, C, H, W].  weights/meta from prepare_rotnet_params()."""
    if tm is None:
        tm = _HW["tm"]
    dt = meta.compute_dtype
    itemsize = jnp.dtype(dt).itemsize
    row_align = 16 if itemsize < 4 else 8          # sublane packing for the dtype

    B = x_nchw.shape[0]
    x_flat = x_nchw.reshape(B, -1)                 # row-major NCHW flatten
    assert x_flat.shape[1] == meta.in_dim

    D_pad, tk, F_pad, N_pad = meta.in_dim_pad, meta.tk, meta.feature_pad, meta.head_pad

    # Big, 256-aligned batch tiles: weight HBM traffic = n_batch_tiles * |W|.
    m_align = _MXU_ALIGN if B >= _MXU_ALIGN else row_align
    tm_eff = min(tm, _round_up(B, m_align))
    B_pad = _round_up(B, tm_eff)
    # v7x (2 TensorCores): ensure >= 2 parallel batch tiles when tm allows.
    if _HW["two_tc"] and B_pad // tm_eff == 1 and tm_eff % (2 * _MXU_ALIGN) == 0:
        tm_eff //= 2

    x_p = jnp.zeros((B_pad, D_pad), dt).at[:B, :meta.in_dim].set(x_flat.astype(dt))

    n_bt = B_pad // tm_eff
    grid = (n_bt, D_pad // tk)

    cost = pl.CostEstimate(
        flops=2 * B_pad * D_pad * F_pad + 2 * B_pad * F_pad * N_pad,
        transcendentals=0,
        bytes_accessed=x_p.size * itemsize
        + n_bt * ((weights["wb"].size + weights["wh"].size) * itemsize
                  + (weights["bb"].size + weights["bh"].size) * 4)
        + B_pad * N_pad * 4,
    )

    out = pl.pallas_call(
        _rotnet_kernel,
        out_shape=jax.ShapeDtypeStruct((B_pad, N_pad), jnp.float32),
        grid=grid,
        in_specs=[
            pl.BlockSpec((tm_eff, tk), lambda i, k: (i, k)),   # x tile
            pl.BlockSpec((tk, F_pad), lambda i, k: (k, 0)),    # w_backbone slab (streamed)
            pl.BlockSpec((1, F_pad), lambda i, k: (0, 0)),     # b_backbone
            pl.BlockSpec((F_pad, N_pad), lambda i, k: (0, 0)), # fused head W
            pl.BlockSpec((1, N_pad), lambda i, k: (0, 0)),     # fused head b
        ],
        out_specs=pl.BlockSpec((tm_eff, N_pad), lambda i, k: (i, 0)),
        scratch_shapes=[pltpu.VMEM((tm_eff, F_pad), jnp.float32)],
        compiler_params=pltpu.CompilerParams(
            dimension_semantics=("parallel", "arbitrary"),
            vmem_limit_bytes=_HW["vmem_limit"],
        ),
        cost_estimate=cost,
    )(x_p, weights["wb"], weights["bb"], weights["wh"], weights["bh"])

    nc = meta.num_classes
    logits = out[:B, :nc]
    rot_logits = out[:B, nc:nc + 4]
    if return_rot_logits:
        return logits, rot_logits
    return logits


def init_params(key, in_dim, feature_size, num_classes):
    ks = jax.random.split(key, 6)
    scale_b = 1.0 / jnp.sqrt(in_dim)
    scale_f = 1.0 / jnp.sqrt(feature_size)
    return {
        "w_backbone": jax.random.normal(ks[0], (in_dim, feature_size), jnp.float32) * scale_b,
        "b_backbone": jax.random.normal(ks[1], (1, feature_size), jnp.float32) * 0.01,
        "w_fc":       jax.random.normal(ks[2], (feature_size, num_classes), jnp.float32) * scale_f,
        "b_fc":       jax.random.normal(ks[3], (1, num_classes), jnp.float32) * 0.01,
        "w_rot":      jax.random.normal(ks[4], (feature_size, 4), jnp.float32) * scale_f,
        "b_rot":      jax.random.normal(ks[5], (1, 4), jnp.float32) * 0.01,
    }


def rotnet_reference(x_nchw, params, compute_dtype=jnp.bfloat16):
    """Pure-JAX reference with the same operand dtypes / f32 accumulation."""
    x = x_nchw.reshape(x_nchw.shape[0], -1).astype(compute_dtype)
    wb = params["w_backbone"].astype(compute_dtype)
    feat = jnp.dot(x, wb, preferred_element_type=jnp.float32) + params["b_backbone"]
    feat = jnp.maximum(feat, 0.0).astype(compute_dtype)
    wfc = params["w_fc"].astype(compute_dtype)
    wrot = params["w_rot"].astype(compute_dtype)
    logits = jnp.dot(feat, wfc, preferred_element_type=jnp.float32) + params["b_fc"]
    rot = jnp.dot(feat, wrot, preferred_element_type=jnp.float32) + params["b_rot"]
    return logits, rot


if __name__ == "__main__":
    B, C, H, W = 2, 4, 16, 16
    feature_size, num_classes = 32, 10

    key = jax.random.PRNGKey(0)
    k_x, k_p = jax.random.split(key)
    x = jax.random.normal(k_x, (B, C, H, W), jnp.float32)
    params = init_params(k_p, C * H * W, feature_size, num_classes)

    # --- strict f32 correctness check --------------------------------------
    w32, m32 = prepare_rotnet_params(params, compute_dtype=jnp.float32)
    logits_f32, rot_f32 = rotnet_forward(x, w32, m32, return_rot_logits=True)
    ref_l32, ref_r32 = rotnet_reference(x, params, compute_dtype=jnp.float32)
    jax.block_until_ready((logits_f32, rot_f32))
    assert logits_f32.shape == (B, num_classes) and rot_f32.shape == (B, 4)
    assert jnp.allclose(logits_f32, ref_l32, atol=1e-4, rtol=1e-4)
    assert jnp.allclose(rot_f32, ref_r32, atol=1e-4, rtol=1e-4)

    # --- default bf16 fast path (f32 MXU accumulation) ----------------------
    wbf, mbf = prepare_rotnet_params(params, compute_dtype=jnp.bfloat16)
    logits = rotnet_forward(x, wbf, mbf, return_rot_logits=False)     # logits only
    logits2, rot_logits = rotnet_forward(x, wbf, mbf, return_rot_logits=True)
    jax.block_until_ready((logits, logits2, rot_logits))
    ref_logits, ref_rot = rotnet_reference(x, params, compute_dtype=jnp.bfloat16)
    assert logits.shape == (B, num_classes)
    assert rot_logits.shape == (B, 4)
    assert jnp.allclose(logits, logits2, atol=1e-6, rtol=1e-6)
    assert jnp.allclose(logits, ref_logits, atol=5e-2, rtol=5e-2)
    assert jnp.allclose(rot_logits, ref_rot, atol=5e-2, rtol=5e-2)

    print("KERNEL_OK")
</pallas_src>

<mosaic_0001>
module attributes {stable_mosaic.version = 11 : i64} {
  func.func @_rotnet_kernel(%arg0: i32, %arg1: i32, %arg2: memref<8x512xf32, #tpu.memory_space<vmem>>, %arg3: memref<512x256xf32, #tpu.memory_space<vmem>>, %arg4: memref<1x256xf32, #tpu.memory_space<vmem>>, %arg5: memref<256x128xf32, #tpu.memory_space<vmem>>, %arg6: memref<1x128xf32, #tpu.memory_space<vmem>>, %arg7: memref<8x128xf32, #tpu.memory_space<vmem>>, %arg8: memref<8x256xf32, #tpu.memory_space<vmem>>) attributes {dimension_semantics = [#tpu.dimension_semantics<parallel>, #tpu.dimension_semantics<arbitrary>], iteration_bounds = array<i64: 1, 2>, scalar_prefetch = 0 : i64, scratch_operands = 1 : i64, tpu.core_type = #tpu.core_type<tc>, window_params = [{transform_indices = @transform_0, window_bounds = array<i64: 8, 512>}, {transform_indices = @transform_1, window_bounds = array<i64: 512, 256>}, {pipeline_mode = #tpu.pipeline_mode<synchronous>, transform_indices = @transform_2, window_bounds = array<i64: 1, 256>}, {pipeline_mode = #tpu.pipeline_mode<synchronous>, transform_indices = @transform_3, window_bounds = array<i64: 256, 128>}, {pipeline_mode = #tpu.pipeline_mode<synchronous>, transform_indices = @transform_4, window_bounds = array<i64: 1, 128>}, {transform_indices = @transform_5, window_bounds = array<i64: 8, 128>}]} {
    %c0_i32 = arith.constant 0 : i32
    %0 = arith.cmpi eq, %arg1, %c0_i32 : i32
    %1 = arith.extui %0 : i1 to i32
    %c0_i32_0 = arith.constant 0 : i32
    %2 = arith.cmpi ne, %1, %c0_i32_0 : i32
    scf.if %2 {
      %cst_9 = arith.constant 0.000000e+00 : f32
      %12 = vector.broadcast %cst_9 : f32 to vector<8x256xf32>
      %c0_10 = arith.constant 0 : index
      %c0_11 = arith.constant 0 : index
      %13 = vector.load %arg8[%c0_10, %c0_11] : memref<8x256xf32, #tpu.memory_space<vmem>>, vector<8x256xf32>
      tpu.vector_store %arg8[%c0_10, %c0_11], %12 {strides = array<i32>} : memref<8x256xf32, #tpu.memory_space<vmem>>, vector<8x256xf32>,
    } else {
    }
    %c0 = arith.constant 0 : index
    %c0_1 = arith.constant 0 : index
    %3 = vector.load %arg8[%c0, %c0_1] : memref<8x256xf32, #tpu.memory_space<vmem>>, vector<8x256xf32>
    %c0_2 = arith.constant 0 : index
    %c0_3 = arith.constant 0 : index
    %4 = vector.load %arg2[%c0_2, %c0_3] : memref<8x512xf32, #tpu.memory_space<vmem>>, vector<8x512xf32>
    %c0_4 = arith.constant 0 : index
    %c0_5 = arith.constant 0 : index
    %5 = vector.load %arg3[%c0_4, %c0_5] : memref<512x256xf32, #tpu.memory_space<vmem>>, vector<512x256xf32>
    %cst = arith.constant dense<0.000000e+00> : vector<8x256xf32>
    %6 = tpu.matmul %4, %5, %cst {dimension_numbers = #tpu.dot_dimension_numbers<[1], [0], [0], [1], [0, 0, 1, 1], [], []>} : vector<8x512xf32>, vector<512x256xf32>, vector<8x256xf32> -> vector<8x256xf32>
    %7 = arith.addf %3, %6 : vector<8x256xf32>
    %c0_6 = arith.constant 0 : index
    %c0_7 = arith.constant 0 : index
    %8 = vector.load %arg8[%c0_6, %c0_7] : memref<8x256xf32, #tpu.memory_space<vmem>>, vector<8x256xf32>
    tpu.vector_store %arg8[%c0_6, %c0_7], %7 {strides = array<i32>} : memref<8x256xf32, #tpu.memory_space<vmem>>, vector<8x256xf32>,
    %c1_i32 = arith.constant 1 : i32
    %9 = arith.cmpi eq, %arg1, %c1_i32 : i32
    %10 = arith.extui %9 : i1 to i32
    %c0_i32_8 = arith.constant 0 : i32
    %11 = arith.cmpi ne, %10, %c0_i32_8 : i32
    scf.if %11 {
      %c0_9 = arith.constant 0 : index
      %c0_10 = arith.constant 0 : index
      %12 = vector.load %arg8[%c0_9, %c0_10] : memref<8x256xf32, #tpu.memory_space<vmem>>, vector<8x256xf32>
      %c0_11 = arith.constant 0 : index
      %c0_12 = arith.constant 0 : index
      %13 = vector.load %arg4[%c0_11, %c0_12] : memref<1x256xf32, #tpu.memory_space<vmem>>, vector<1x256xf32>
      %14 = vector.broadcast %13 : vector<1x256xf32> to vector<8x256xf32>
      %15 = arith.addf %12, %14 : vector<8x256xf32>
      %cst_13 = arith.constant 0.000000e+00 : f32
      %16 = vector.broadcast %cst_13 : f32 to vector<8x256xf32>
      %17 = arith.maximumf %15, %16 : vector<8x256xf32>
      %c0_14 = arith.constant 0 : index
      %c0_15 = arith.constant 0 : index
      %18 = vector.load %arg5[%c0_14, %c0_15] : memref<256x128xf32, #tpu.memory_space<vmem>>, vector<256x128xf32>
      %cst_16 = arith.constant dense<0.000000e+00> : vector<8x128xf32>
      %19 = tpu.matmul %17, %18, %cst_16 {dimension_numbers = #tpu.dot_dimension_numbers<[1], [0], [0], [1], [0, 0, 1, 1], [], []>} : vector<8x256xf32>, vector<256x128xf32>, vector<8x128xf32> -> vector<8x128xf32>
      %c0_17 = arith.constant 0 : index
      %c0_18 = arith.constant 0 : index
      %20 = vector.load %arg6[%c0_17, %c0_18] : memref<1x128xf32, #tpu.memory_space<vmem>>, vector<1x128xf32>
      %21 = vector.broadcast %20 : vector<1x128xf32> to vector<8x128xf32>
      %22 = arith.addf %19, %21 : vector<8x128xf32>
      %c0_19 = arith.constant 0 : index
      %c0_20 = arith.constant 0 : index
      %23 = vector.load %arg7[%c0_19, %c0_20] : memref<8x128xf32, #tpu.memory_space<vmem>>, vector<8x128xf32>
      tpu.vector_store %arg7[%c0_19, %c0_20], %22 {strides = array<i32>} : memref<8x128xf32, #tpu.memory_space<vmem>>, vector<8x128xf32>,
    } else {
    }
    return
  }
  func.func @transform_0(%arg0: i32, %arg1: i32) -> (i32, i32) {
    %c0_i32 = arith.constant 0 : i32
    return %arg0, %arg1 : i32, i32
  }
  func.func @transform_1(%arg0: i32, %arg1: i32) -> (i32, i32) {
    %c0_i32 = arith.constant 0 : i32
    %c0_i32_0 = arith.constant 0 : i32
    return %arg1, %c0_i32 : i32, i32
  }
  func.func @transform_2(%arg0: i32, %arg1: i32) -> (i32, i32) {
    %c0_i32 = arith.constant 0 : i32
    %c0_i32_0 = arith.constant 0 : i32
    %c0_i32_1 = arith.constant 0 : i32
    return %c0_i32, %c0_i32_0 : i32, i32
  }
  func.func @transform_3(%arg0: i32, %arg1: i32) -> (i32, i32) {
    %c0_i32 = arith.constant 0 : i32
    %c0_i32_0 = arith.constant 0 : i32
    %c0_i32_1 = arith.constant 0 : i32
    return %c0_i32, %c0_i32_0 : i32, i32
  }
  func.func @transform_4(%arg0: i32, %arg1: i32) -> (i32, i32) {
    %c0_i32 = arith.constant 0 : i32
    %c0_i32_0 = arith.constant 0 : i32
    %c0_i32_1 = arith.constant 0 : i32
    return %c0_i32, %c0_i32_0 : i32, i32
  }
  func.func @transform_5(%arg0: i32, %arg1: i32) -> (i32, i32) {
    %c0_i32 = arith.constant 0 : i32
    %c0_i32_0 = arith.constant 0 : i32
    return %arg0, %c0_i32 : i32, i32
  }
}

</mosaic_0001>

<llo_original>
// kernel: rotnet_forward.1
$region0: #{rotnet_forward.1}
  #allocation0 [shape = 'u32[]', space=smem, size = 0x4, offset = 0x4, fixed_abs, tag = 'smem constant byte address 0x4 - core index']
  #allocation1 [shape = 'u32[144,128]{1,0:T(1,128)}', space=vmem, size = 0x12000, scoped, tag = 'internal scratch']
  #allocation2 [shape = 'f32[8,256]{1,0:T(8,128)}', space=vmem, size = 0x2000, scoped, tag = 'scratch operand']
  %s0 = inlined_call_operand.vmem [shape: f32[8,1024], index: 0, kind: input, shape index: {}]
  %s1 = inlined_call_operand.hbm [shape: f32[1024,256], index: 1, kind: input, shape index: {}]
  %s2 = inlined_call_operand.vmem [shape: f32[1,256], index: 2, kind: input, shape index: {}]
  %s3 = inlined_call_operand.hbm [shape: f32[256,128], index: 3, kind: input, shape index: {}]
  %s4 = inlined_call_operand.vmem [shape: f32[1,128], index: 4, kind: input, shape index: {}]
  %s5 = inlined_call_operand.vmem [shape: f32[8,128], index: 5, kind: output, shape index: {}]
  %s6 = sld [smem:[#allocation0]]
  $region69: #{rotnet_forward.1} parent=0
    _
  %s8 = ssub.s32 1, %s6
  %s9 = scalar_select 0, %s8, %s6
  $region1: #{rotnet_forward.1} parent=0
    #allocation3 [shape = 'u8[1048576]{0}', space=vmem, size = 0x100000, scoped, tag = 'input window, operand 1']
    #allocation4 [shape = 's32[2]{0}', space=sflag, size = 0x8, scoped, tag = 'scoped memory for rotnet_forward.1']
    #allocation5 [shape = 'u8[131072]{0}', space=vmem, size = 0x20000, scoped, tag = 'input window, operand 3, single buffered']
    #allocation6 [shape = 's32[1]{0}', space=sflag, size = 0x4, scoped, tag = 'scoped memory for rotnet_forward.1']
    %10 = vsyncpa [#allocation4], 0
    %s11 = scalar_lea.sflag [#allocation4], 1
    %12 = vsyncpa %s11, 0
    %13 = vsyncpa [#allocation6], 0
    loop: start=0, step=1, limit=4
    $region2: #{rotnet_forward.1} parent=1 // loop_pre_header
      _
    $region3: #{rotnet_forward.1} parent=1 // loop_header
      %s15 = sphi 0, %s19
      %p16 = scmp.ge.s32.totalorder %s15, 4
      %s22 = sphi 0, %s34
      %s23 = sphi 0, %s30
      %s24 = sphi 0, %s22
      %s25 = sphi 0, %s23
      %s26 = sphi 0, %s24
      %s27 = sphi 0, %s25
      %s39 = sphi 0, %s41
      %s42 = sphi 0, %s39
      %s43 = sphi 0, %s42
      %s59 = sphi 0, %s43
      %s65 = sphi 0, %s67
      %s68 = sphi 0, %s65
      %s69 = sphi 0, %s68
      %s85 = sphi 0, %s69
      %s89 = sphi 0, %s89
      %s91 = sphi 0, %s89
      %s92 = sphi 0, %s91
      %s106 = sphi 0, %s92
      %s110 = sphi 0, %s110
      %s112 = sphi 0, %s110
      %s113 = sphi 0, %s112
      %s127 = sphi 0, %s113
      %s131 = sphi 0, %s131
      %s133 = sphi 0, %s131
      %s134 = sphi 0, %s133
      %s148 = sphi 0, %s134
      %s154 = sphi 0, %s156
      %s157 = sphi 0, %s154
      %s158 = sphi 0, %s157
      %s174 = sphi 0, %s158
    $region4: #{rotnet_forward.1} parent=1 // loop_header_branch
      %18 = sbr.rel (%p16) target = $region8
    $region5: #{rotnet_forward.1} parent=1 // loop_body
      %s20 = ssub.s32 %s15, 1
      %s21 = ssub.s32 %s15, 2
      %s28 = sadd.s32 1, %s23
      %p29 = scmp.ge.s32.totalorder %s28, 2
      %s30 = scalar_select %p29, 0, %s28
      %s31 = sadd.s32 1, %s22
      %s32 = scalar_select %p29, %s31, %s22
      %p33 = scmp.ge.s32.totalorder %s32, 1
      %s34 = scalar_select %p33, 0, %s32
      %s35 = ssub.s32 %s22, %s34
      %s36 = ssub.s32 %s23, %s30
      %s37 = sor.u32 %s35, %s36
      %p38 = scmp.eq.s32.totalorder %s37, 0
      %s40 = sadd.s32 %s39, 1
      %s41 = scalar_select %p38, %s39, %s40
      %p44 = pneg %p38
      %p45 = scmp.eq.s32.totalorder %s15, 1
      %p46 = por %p44, %p45
      %p47 = scmp.ne.s32.totalorder %s39, %s42
      %p48 = scmp.eq.s32.totalorder %s15, 0
      %p49 = por %p47, %p48
      %p50 = scmp.ne.s32.totalorder %s39, %s42
      %p51 = scmp.eq.s32.totalorder %s20, 1
      %p52 = por %p50, %p51
      %p53 = scmp.ne.s32.totalorder %s42, %s43
      %p54 = scmp.eq.s32.totalorder %s20, 0
      %p55 = por %p53, %p54
      %p56 = scmp.ne.s32.totalorder %s42, %s43
      %p57 = scmp.eq.s32.totalorder %s21, 1
      %p58 = por %p56, %p57
      %p60 = scmp.ne.s32.totalorder %s43, %s59
      %p61 = scmp.eq.s32.totalorder %s21, 0
      %p62 = por %p60, %p61
      %s63 = ssub.s32 %s23, %s30
      %p64 = scmp.eq.s32.totalorder %s63, 0
      %s66 = sadd.s32 %s65, 1
      %s67 = scalar_select %p64, %s65, %s66
      %p70 = pneg %p64
      %p71 = scmp.eq.s32.totalorder %s15, 1
      %p72 = por %p70, %p71
      %p73 = scmp.ne.s32.totalorder %s65, %s68
      %p74 = scmp.eq.s32.totalorder %s15, 0
      %p75 = por %p73, %p74
      %p76 = scmp.ne.s32.totalorder %s65, %s68
      %p77 = scmp.eq.s32.totalorder %s20, 1
      %p78 = por %p76, %p77
      %p79 = scmp.ne.s32.totalorder %s68, %s69
      %p80 = scmp.eq.s32.totalorder %s20, 0
      %p81 = por %p79, %p80
      %p82 = scmp.ne.s32.totalorder %s68, %s69
      %p83 = scmp.eq.s32.totalorder %s21, 1
      %p84 = por %p82, %p83
      %p86 = scmp.ne.s32.totalorder %s69, %s85
      %p87 = scmp.eq.s32.totalorder %s21, 0
      %p88 = por %p86, %p87
      %s90 = sadd.s32 %s89, 1
      %p93 = scmp.eq.s32.totalorder %s15, 1
      %p94 = scmp.ne.s32.totalorder %s89, %s91
      %p95 = scmp.eq.s32.totalorder %s15, 0
      %p96 = por %p94, %p95
      %p97 = scmp.ne.s32.totalorder %s89, %s91
      %p98 = scmp.eq.s32.totalorder %s20, 1
      %p99 = por %p97, %p98
      %p100 = scmp.ne.s32.totalorder %s91, %s92
      %p101 = scmp.eq.s32.totalorder %s20, 0
      %p102 = por %p100, %p101
      %p103 = scmp.ne.s32.totalorder %s91, %s92
      %p104 = scmp.eq.s32.totalorder %s21, 1
      %p105 = por %p103, %p104
      %p107 = scmp.ne.s32.totalorder %s92, %s106
      %p108 = scmp.eq.s32.totalorder %s21, 0
      %p109 = por %p107, %p108
      %s111 = sadd.s32 %s110, 1
      %p114 = scmp.eq.s32.totalorder %s15, 1
      %p115 = scmp.ne.s32.totalorder %s110, %s112
      %p116 = scmp.eq.s32.totalorder %s15, 0
      %p117 = por %p115, %p116
      %p118 = scmp.ne.s32.totalorder %s110, %s112
      %p119 = scmp.eq.s32.totalorder %s20, 1
      %p120 = por %p118, %p119
      %p121 = scmp.ne.s32.totalorder %s112, %s113
      %p122 = scmp.eq.s32.totalorder %s20, 0
      %p123 = por %p121, %p122
      %p124 = scmp.ne.s32.totalorder %s112, %s113
      %p125 = scmp.eq.s32.totalorder %s21, 1
      %p126 = por %p124, %p125
      %p128 = scmp.ne.s32.totalorder %s113, %s127
      %p129 = scmp.eq.s32.totalorder %s21, 0
      %p130 = por %p128, %p129
      %s132 = sadd.s32 %s131, 1
      %p135 = scmp.eq.s32.totalorder %s15, 1
      %p136 = scmp.ne.s32.totalorder %s131, %s133
      %p137 = scmp.eq.s32.totalorder %s15, 0
      %p138 = por %p136, %p137
      %p139 = scmp.ne.s32.totalorder %s131, %s133
      %p140 = scmp.eq.s32.totalorder %s20, 1
      %p141 = por %p139, %p140
      %p142 = scmp.ne.s32.totalorder %s133, %s134
      %p143 = scmp.eq.s32.totalorder %s20, 0
      %p144 = por %p142, %p143
      %p145 = scmp.ne.s32.totalorder %s133, %s134
      %p146 = scmp.eq.s32.totalorder %s21, 1
      %p147 = por %p145, %p146
      %p149 = scmp.ne.s32.totalorder %s134, %s148
      %p150 = scmp.eq.s32.totalorder %s21, 0
      %p151 = por %p149, %p150
      %s152 = ssub.s32 %s22, %s34
      %p153 = scmp.eq.s32.totalorder %s152, 0
      %s155 = sadd.s32 %s154, 1
      %s156 = scalar_select %p153, %s154, %s155
      %p159 = pneg %p153
      %p160 = scmp.eq.s32.totalorder %s15, 1
      %p161 = por %p159, %p160
      %p162 = scmp.ne.s32.totalorder %s154, %s157
      %p163 = scmp.eq.s32.totalorder %s15, 0
      %p164 = por %p162, %p163
      %p165 = scmp.ne.s32.totalorder %s154, %s157
      %p166 = scmp.eq.s32.totalorder %s20, 1
      %p167 = por %p165, %p166
      %p168 = scmp.ne.s32.totalorder %s157, %s158
      %p169 = scmp.eq.s32.totalorder %s20, 0
      %p170 = por %p168, %p169
      %p171 = scmp.ne.s32.totalorder %s157, %s158
      %p172 = scmp.eq.s32.totalorder %s21, 1
      %p173 = por %p171, %p172
      %p175 = scmp.ne.s32.totalorder %s158, %s174
      %p176 = scmp.eq.s32.totalorder %s21, 0
      %p177 = por %p175, %p176
      %p178 = scmp.le.s32.totalorder 1, %s15
      %p179 = scmp.lt.s32.totalorder %s15, 3
      %p180 = pnand %p178, %p179
      %p181 = pneg %p180
      // Predicated region
      $region9: #{rotnet_forward.1} parent=5 // pred_check
        _
      $region10: #{rotnet_forward.1} parent=5 // pred_check_branch
        %183 = sbr.rel (%p180) target = $region12
      $region11: #{rotnet_forward.1} parent=5 // pred_region
        %s184 = ssub.s32 %s15, 1
        // Predicated region
        $region13: #{rotnet_forward.1} parent=11 // pred_check
          %p185 = pneg %p102
        $region14: #{rotnet_forward.1} parent=11 // pred_check_branch
          %187 = sbr.rel (%p185) target = $region16
        $region15: #{rotnet_forward.1} parent=11 // pred_region
          _
        $region16: #{rotnet_forward.1} parent=11 // pred_fallthru
          _
        // Predicated region
        $region17: #{rotnet_forward.1} parent=11 // pred_check
          %p188 = pneg %p123
        $region18: #{rotnet_forward.1} parent=11 // pred_check_branch
          %190 = sbr.rel (%p188) target = $region20
        $region19: #{rotnet_forward.1} parent=11 // pred_region
          %s192 = ssub.s32 4096, 4096
          %193 = vsyncadd [#allocation6], %s192
          %s194 = sshll.u32 [#allocation5], 4
          %s195 = int_to_ptr.vmem [resolvable:$true] %s194
          %200 = dma.hbm_to_vmem [thread:$0]  %s3, 4096, %s195, [#allocation6], 128, 128, 8
        $region20: #{rotnet_forward.1} parent=11 // pred_fallthru
          _
        // Predicated region
        $region21: #{rotnet_forward.1} parent=11 // pred_check
          %p201 = pneg %p144
        $region22: #{rotnet_forward.1} parent=11 // pred_check_branch
          %203 = sbr.rel (%p201) target = $region24
        $region23: #{rotnet_forward.1} parent=11 // pred_region
          _
        $region24: #{rotnet_forward.1} parent=11 // pred_fallthru
          _
      $region12: #{rotnet_forward.1} parent=5 // pred_fallthru
        _
      %p204 = scmp.lt.s32.totalorder %s15, 2
      // Predicated region
      $region25: #{rotnet_forward.1} parent=5 // pred_check
        %p205 = pneg %p204
      $region26: #{rotnet_forward.1} parent=5 // pred_check_branch
        %207 = sbr.rel (%p205) target = $region28
      $region27: #{rotnet_forward.1} parent=5 // pred_region
        // Predicated region
        $region29: #{rotnet_forward.1} parent=27 // pred_check
          %p208 = pneg %p49
        $region30: #{rotnet_forward.1} parent=27 // pred_check_branch
          %210 = sbr.rel (%p208) target = $region32
        $region31: #{rotnet_forward.1} parent=27 // pred_region
          %s211 = smul.u32 4, %s23
          %p212 = scmp.lt.s32.totalorder %s22, 0
          %s213 = scalar_select %p212, %s22, 0
          %p214 = scmp.lt.s32.totalorder %s211, 7
          %s215 = scalar_select %p214, %s211, 7
          %s216 = smul.addr %s213, 8
          %s217 = sadd.s32 %s215, %s216
          %s218 = smul.addr %s217, 8
          %s219 = scalar_lea.vmem %s0, %s218
          %s220 = smul.u32 4, %s23
        $region32: #{rotnet_forward.1} parent=27 // pred_fallthru
          _
        // Predicated region
        $region33: #{rotnet_forward.1} parent=27 // pred_check
          %p221 = pneg %p75
        $region34: #{rotnet_forward.1} parent=27 // pred_check_branch
          %223 = sbr.rel (%p221) target = $region36
        $region35: #{rotnet_forward.1} parent=27 // pred_region
          %s224 = sand.u32 %s65, 1
          %s225 = scalar_lea.sflag [#allocation4], %s224
          %s226 = sand.u32 %s65, 1
          %s227 = smul.addr %s226, 1024
          %s228 = scalar_lea.vmem [#allocation3], %s227
          %s229 = smul.u32 64, %s23
          %s231 = ssub.s32 16384, 16384
          %232 = vsyncadd %s225, %s231
          %s233 = smul.addr %s229, 2
          %s234 = smul.addr %s233, 128
          %s235 = scalar_lea.hbm %s1, %s234
          %s236 = sshll.u32 %s228, 4
          %s237 = int_to_ptr.vmem [resolvable:$true] %s236
          %242 = dma.hbm_to_vmem [thread:$0]  %s235, 16384, %s237, %s225, 256, 256, 16
        $region36: #{rotnet_forward.1} parent=27 // pred_fallthru
          _
      $region28: #{rotnet_forward.1} parent=5 // pred_fallthru
        _
      %p243 = scmp.le.s32.totalorder 1, %s15
      %p244 = scmp.lt.s32.totalorder %s15, 3
      %p245 = pnand %p243, %p244
      %p246 = pneg %p245
      // Predicated region
      $region37: #{rotnet_forward.1} parent=5 // pred_check
        _
      $region38: #{rotnet_forward.1} parent=5 // pred_check_branch
        %248 = sbr.rel (%p245) target = $region40
      $region39: #{rotnet_forward.1} parent=5 // pred_region
        %s249 = ssub.s32 %s15, 1
        %s250 = sand.u32 %s68, 1
        %s251 = scalar_lea.sflag [#allocation4], %s250
        %s252 = sand.u32 %s68, 1
        %s253 = smul.addr %s252, 1024
        %s254 = scalar_lea.vmem [#allocation3], %s253
        // Predicated region
        $region41: #{rotnet_forward.1} parent=39 // pred_check
          %p255 = pneg %p81
        $region42: #{rotnet_forward.1} parent=39 // pred_check_branch
          %257 = sbr.rel (%p255) target = $region44
        $region43: #{rotnet_forward.1} parent=39 // pred_region
          %258 = dma.done %s251, 16384
        $region44: #{rotnet_forward.1} parent=39 // pred_fallthru
          _
        // Predicated region
        $region45: #{rotnet_forward.1} parent=39 // pred_check
          %p259 = pneg %p123
        $region46: #{rotnet_forward.1} parent=39 // pred_check_branch
          %261 = sbr.rel (%p259) target = $region48
        $region47: #{rotnet_forward.1} parent=39 // pred_region
          %262 = dma.done [#allocation6], 4096
        $region48: #{rotnet_forward.1} parent=39 // pred_fallthru
          _
        %s263 = smul.u32 4, %s25
        %p264 = scmp.lt.s32.totalorder %s24, 0
        %s265 = scalar_select %p264, %s24, 0
        %p266 = scmp.lt.s32.totalorder %s263, 7
        %s267 = scalar_select %p266, %s263, 7
        %s268 = smul.addr %s265, 8
        %s269 = sadd.s32 %s267, %s268
        %s270 = smul.addr %s269, 8
        %s271 = scalar_lea.vmem %s0, %s270
        %p272 = pneg %p55
        %p273 = pneg %p52
        %s274 = sand.u32 %s68, 1
        %s275 = scalar_lea.sflag [#allocation4], %s274
        %s276 = sand.u32 %s68, 1
        %s277 = smul.addr %s276, 1024
        %s278 = scalar_lea.vmem [#allocation3], %s277
        %p279 = pneg %p81
        %p280 = pneg %p78
        %p281 = pneg %p102
        %p282 = pneg %p99
        %p283 = pneg %p123
        %p284 = pneg %p120
        %p285 = pneg %p144
        %p286 = pneg %p141
        %p287 = pneg %p170
        %p288 = pneg %p167
        %p289 = scmp.lt.s32.totalorder %s24, 0
        %s290 = scalar_select %p289, %s24, 0
        %s291 = smul.addr %s290, 8
        %s292 = scalar_lea.vmem %s5, %s291
        %s293 = smul.u32 4, %s25
        %p294 = scmp.lt.s32.totalorder %s24, 0
        %s295 = scalar_select %p294, %s24, 0
        %p296 = scmp.lt.s32.totalorder %s293, 7
        %s297 = scalar_select %p296, %s293, 7
        %s298 = smul.addr %s295, 8
        %s299 = sadd.s32 %s297, %s298
        %s300 = smul.addr %s299, 8
        %s301 = scalar_lea.vmem %s0, %s300
        %s302 = smul.u32 4, %s25
        %s303 = smul.u32 64, %s25
        %p304 = scmp.lt.s32.totalorder %s24, 0
        %s305 = scalar_select %p304, %s24, 0
        %s306 = smul.addr %s305, 8
        %s307 = scalar_lea.vmem %s5, %s306
        %p308 = scmp.eq.s32.totalorder %s25, 0
        // Predicated region
        $region49: #{rotnet_forward.1} parent=39 // pred_check
          %p309 = pneg %p308
        $region50: #{rotnet_forward.1} parent=39 // pred_check_branch
          %311 = sbr.rel (%p309) target = $region52
        $region51: #{rotnet_forward.1} parent=39 // pred_region
          %312 = vst [vmem:[#allocation2] sm:$0xff] 0.0
          %313 = vst [vmem:[#allocation2 + $0x8] sm:$0xff] 0.0
        $region52: #{rotnet_forward.1} parent=39 // pred_fallthru
          _
        %v314 = vld [vmem:[#allocation2] sm:$0xff]
        %v315 = vld [vmem:[#allocation2 + $0x8] sm:$0xff]
        %v316 = vld [vmem:[%s301] sm:$0xff]
        %v317 = vld [vmem:[%s301 + $0x8] sm:$0xff]
        %v318 = vld [vmem:[%s301 + $0x10] sm:$0xff]
        %v319 = vld [vmem:[%s301 + $0x18] sm:$0xff]
        %v320 = vld [vmem:[%s254] sm:$0xff]
        %v321 = vld [vmem:[%s254 + $0x8] sm:$0xff]
        %v322 = vld [vmem:[%s254 + $0x10] sm:$0xff]
        %v323 = vld [vmem:[%s254 + $0x18] sm:$0xff]
        %v324 = vld [vmem:[%s254 + $0x20] sm:$0xff]
        %v325 = vld [vmem:[%s254 + $0x28] sm:$0xff]
        %v326 = vld [vmem:[%s254 + $0x30] sm:$0xff]
        %v327 = vld [vmem:[%s254 + $0x38] sm:$0xff]
        %v328 = vld [vmem:[%s254 + $0x40] sm:$0xff]
        %v329 = vld [vmem:[%s254 + $0x48] sm:$0xff]
        %v330 = vld [vmem:[%s254 + $0x50] sm:$0xff]
        %v331 = vld [vmem:[%s254 + $0x58] sm:$0xff]
        %v332 = vld [vmem:[%s254 + $0x60] sm:$0xff]
        %v333 = vld [vmem:[%s254 + $0x68] sm:$0xff]
        %v334 = vld [vmem:[%s254 + $0x70] sm:$0xff]
        %v335 = vld [vmem:[%s254 + $0x78] sm:$0xff]
        %v336 = vld [vmem:[%s254 + $0x80] sm:$0xff]
        %v337 = vld [vmem:[%s254 + $0x88] sm:$0xff]
        %v338 = vld [vmem:[%s254 + $0x90] sm:$0xff]
        %v339 = vld [vmem:[%s254 + $0x98] sm:$0xff]
        %v340 = vld [vmem:[%s254 + $0xa0] sm:$0xff]
        %v341 = vld [vmem:[%s254 + $0xa8] sm:$0xff]
        %v342 = vld [vmem:[%s254 + $0xb0] sm:$0xff]
        %v343 = vld [vmem:[%s254 + $0xb8] sm:$0xff]
        %v344 = vld [vmem:[%s254 + $0xc0] sm:$0xff]
        %v345 = vld [vmem:[%s254 + $0xc8] sm:$0xff]
        %v346 = vld [vmem:[%s254 + $0xd0] sm:$0xff]
        %v347 = vld [vmem:[%s254 + $0xd8] sm:$0xff]
        %v348 = vld [vmem:[%s254 + $0xe0] sm:$0xff]
        %v349 = vld [vmem:[%s254 + $0xe8] sm:$0xff]
        %v350 = vld [vmem:[%s254 + $0xf0] sm:$0xff]
        %v351 = vld [vmem:[%s254 + $0xf8] sm:$0xff]
        %v352 = vld [vmem:[%s254 + $0x100] sm:$0xff]
        %v353 = vld [vmem:[%s254 + $0x108] sm:$0xff]
        %v354 = vld [vmem:[%s254 + $0x110] sm:$0xff]
        %v355 = vld [vmem:[%s254 + $0x118] sm:$0xff]
        %v356 = vld [vmem:[%s254 + $0x120] sm:$0xff]
        %v357 = vld [vmem:[%s254 + $0x128] sm:$0xff]
        %v358 = vld [vmem:[%s254 + $0x130] sm:$0xff]
        %v359 = vld [vmem:[%s254 + $0x138] sm:$0xff]
        %v360 = vld [vmem:[%s254 + $0x140] sm:$0xff]
        %v361 = vld [vmem:[%s254 + $0x148] sm:$0xff]
        %v362 = vld [vmem:[%s254 + $0x150] sm:$0xff]
        %v363 = vld [vmem:[%s254 + $0x158] sm:$0xff]
        %v364 = vld [vmem:[%s254 + $0x160] sm:$0xff]
        %v365 = vld [vmem:[%s254 + $0x168] sm:$0xff]
        %v366 = vld [vmem:[%s254 + $0x170] sm:$0xff]
        %v367 = vld [vmem:[%s254 + $0x178] sm:$0xff]
        %v368 = vld [vmem:[%s254 + $0x180] sm:$0xff]
        %v369 = vld [vmem:[%s254 + $0x188] sm:$0xff]
        %v370 = vld [vmem:[%s254 + $0x190] sm:$0xff]
        %v371 = vld [vmem:[%s254 + $0x198] sm:$0xff]
        %v372 = vld [vmem:[%s254 + $0x1a0] sm:$0xff]
        %v373 = vld [vmem:[%s254 + $0x1a8] sm:$0xff]
        %v374 = vld [vmem:[%s254 + $0x1b0] sm:$0xff]
        %v375 = vld [vmem:[%s254 + $0x1b8] sm:$0xff]
        %v376 = vld [vmem:[%s254 + $0x1c0] sm:$0xff]
        %v377 = vld [vmem:[%s254 + $0x1c8] sm:$0xff]
        %v378 = vld [vmem:[%s254 + $0x1d0] sm:$0xff]
        %v379 = vld [vmem:[%s254 + $0x1d8] sm:$0xff]
        %v380 = vld [vmem:[%s254 + $0x1e0] sm:$0xff]
        %v381 = vld [vmem:[%s254 + $0x1e8] sm:$0xff]
        %v382 = vld [vmem:[%s254 + $0x1f0] sm:$0xff]
        %v383 = vld [vmem:[%s254 + $0x1f8] sm:$0xff]
        %v384 = vld [vmem:[%s254 + $0x200] sm:$0xff]
        %v385 = vld [vmem:[%s254 + $0x208] sm:$0xff]
        %v386 = vld [vmem:[%s254 + $0x210] sm:$0xff]
        %v387 = vld [vmem:[%s254 + $0x218] sm:$0xff]
        %v388 = vld [vmem:[%s254 + $0x220] sm:$0xff]
        %v389 = vld [vmem:[%s254 + $0x228] sm:$0xff]
        %v390 = vld [vmem:[%s254 + $0x230] sm:$0xff]
        %v391 = vld [vmem:[%s254 + $0x238] sm:$0xff]
        %v392 = vld [vmem:[%s254 + $0x240] sm:$0xff]
        %v393 = vld [vmem:[%s254 + $0x248] sm:$0xff]
        %v394 = vld [vmem:[%s254 + $0x250] sm:$0xff]
        %v395 = vld [vmem:[%s254 + $0x258] sm:$0xff]
        %v396 = vld [vmem:[%s254 + $0x260] sm:$0xff]
        %v397 = vld [vmem:[%s254 + $0x268] sm:$0xff]
        %v398 = vld [vmem:[%s254 + $0x270] sm:$0xff]
        %v399 = vld [vmem:[%s254 + $0x278] sm:$0xff]
        %v400 = vld [vmem:[%s254 + $0x280] sm:$0xff]
        %v401 = vld [vmem:[%s254 + $0x288] sm:$0xff]
        %v402 = vld [vmem:[%s254 + $0x290] sm:$0xff]
        %v403 = vld [vmem:[%s254 + $0x298] sm:$0xff]
        %v404 = vld [vmem:[%s254 + $0x2a0] sm:$0xff]
        %v405 = vld [vmem:[%s254 + $0x2a8] sm:$0xff]
        %v406 = vld [vmem:[%s254 + $0x2b0] sm:$0xff]
        %v407 = vld [vmem:[%s254 + $0x2b8] sm:$0xff]
        %v408 = vld [vmem:[%s254 + $0x2c0] sm:$0xff]
        %v409 = vld [vmem:[%s254 + $0x2c8] sm:$0xff]
        %v410 = vld [vmem:[%s254 + $0x2d0] sm:$0xff]
        %v411 = vld [vmem:[%s254 + $0x2d8] sm:$0xff]
        %v412 = vld [vmem:[%s254 + $0x2e0] sm:$0xff]
        %v413 = vld [vmem:[%s254 + $0x2e8] sm:$0xff]
        %v414 = vld [vmem:[%s254 + $0x2f0] sm:$0xff]
        %v415 = vld [vmem:[%s254 + $0x2f8] sm:$0xff]
        %v416 = vld [vmem:[%s254 + $0x300] sm:$0xff]
        %v417 = vld [vmem:[%s254 + $0x308] sm:$0xff]
        %v418 = vld [vmem:[%s254 + $0x310] sm:$0xff]
        %v419 = vld [vmem:[%s254 + $0x318] sm:$0xff]
        %v420 = vld [vmem:[%s254 + $0x320] sm:$0xff]
        %v421 = vld [vmem:[%s254 + $0x328] sm:$0xff]
        %v422 = vld [vmem:[%s254 + $0x330] sm:$0xff]
        %v423 = vld [vmem:[%s254 + $0x338] sm:$0xff]
        %v424 = vld [vmem:[%s254 + $0x340] sm:$0xff]
        %v425 = vld [vmem:[%s254 + $0x348] sm:$0xff]
        %v426 = vld [vmem:[%s254 + $0x350] sm:$0xff]
        %v427 = vld [vmem:[%s254 + $0x358] sm:$0xff]
        %v428 = vld [vmem:[%s254 + $0x360] sm:$0xff]
        %v429 = vld [vmem:[%s254 + $0x368] sm:$0xff]
        %v430 = vld [vmem:[%s254 + $0x370] sm:$0xff]
        %v431 = vld [vmem:[%s254 + $0x378] sm:$0xff]
        %v432 = vld [vmem:[%s254 + $0x380] sm:$0xff]
        %v433 = vld [vmem:[%s254 + $0x388] sm:$0xff]
        %v434 = vld [vmem:[%s254 + $0x390] sm:$0xff]
        %v435 = vld [vmem:[%s254 + $0x398] sm:$0xff]
        %v436 = vld [vmem:[%s254 + $0x3a0] sm:$0xff]
        %v437 = vld [vmem:[%s254 + $0x3a8] sm:$0xff]
        %v438 = vld [vmem:[%s254 + $0x3b0] sm:$0xff]
        %v439 = vld [vmem:[%s254 + $0x3b8] sm:$0xff]
        %v440 = vld [vmem:[%s254 + $0x3c0] sm:$0xff]
        %v441 = vld [vmem:[%s254 + $0x3c8] sm:$0xff]
        %v442 = vld [vmem:[%s254 + $0x3d0] sm:$0xff]
        %v443 = vld [vmem:[%s254 + $0x3d8] sm:$0xff]
        %v444 = vld [vmem:[%s254 + $0x3e0] sm:$0xff]
        %v445 = vld [vmem:[%s254 + $0x3e8] sm:$0xff]
        %v446 = vld [vmem:[%s254 + $0x3f0] sm:$0xff]
        %v447 = vld [vmem:[%s254 + $0x3f8] sm:$0xff]
        %448 = vmatprep.subr.mxu0 %v351
        %449 = vmatpush1.msra.mxu0 %v350
        %450 = vmatprep.subr.mxu0 %v349
        %451 = vmatpush1.msra.mxu0 %v348
        %452 = vmatprep.subr.mxu0 %v347
        %453 = vmatpush1.msra.mxu0 %v346
        %454 = vmatprep.subr.mxu0 %v345
        %455 = vmatpush1.msra.mxu0 %v344
        %456 = vmatprep.subr.mxu0 %v343
        %457 = vmatpush1.msra.mxu0 %v342
        %458 = vmatprep.subr.mxu0 %v341
        %459 = vmatpush1.msra.mxu0 %v340
        %460 = vmatprep.subr.mxu0 %v339
        %461 = vmatpush1.msra.mxu0 %v338
        %462 = vmatprep.subr.mxu0 %v337
        %463 = vmatpush1.msra.mxu0 %v336
        %464 = vmatprep.subr.mxu0 %v335
        %465 = vmatpush1.msra.mxu0 %v334
        %466 = vmatprep.subr.mxu0 %v333
        %467 = vmatpush1.msra.mxu0 %v332
        %468 = vmatprep.subr.mxu0 %v331
        %469 = vmatpush1.msra.mxu0 %v330
        %470 = vmatprep.subr.mxu0 %v329
        %471 = vmatpush1.msra.mxu0 %v328
        %472 = vmatprep.subr.mxu0 %v327
        %473 = vmatpush1.msra.mxu0 %v326
        %474 = vmatprep.subr.mxu0 %v325
        %475 = vmatpush1.msra.mxu0 %v324
        %476 = vmatprep.subr.mxu0 %v323
        %477 = vmatpush1.msra.mxu0 %v322
        %478 = vmatprep.subr.mxu0 %v321
        %479 = vmatpush1.msra.mxu0 %v320
        %480 = vmatprep.subr.mxu0 %v383
        %481 = vmatpush2.msra.mxu0 %v382
        %482 = vmatprep.subr.mxu0 %v381
        %483 = vmatpush2.msra.mxu0 %v380
        %484 = vmatprep.subr.mxu0 %v379
        %485 = vmatpush2.msra.mxu0 %v378
        %486 = vmatprep.subr.mxu0 %v377
        %487 = vmatpush2.msra.mxu0 %v376
        %488 = vmatprep.subr.mxu0 %v375
        %489 = vmatpush2.msra.mxu0 %v374
        %490 = vmatprep.subr.mxu0 %v373
        %491 = vmatpush2.msra.mxu0 %v372
        %492 = vmatprep.subr.mxu0 %v371
        %493 = vmatpush2.msra.mxu0 %v370
        %494 = vmatprep.subr.mxu0 %v369
        %495 = vmatpush2.msra.mxu0 %v368
        %496 = vmatprep.subr.mxu0 %v367
        %497 = vmatpush2.msra.mxu0 %v366
        %498 = vmatprep.subr.mxu0 %v365
        %499 = vmatpush2.msra.mxu0 %v364
        %500 = vmatprep.subr.mxu0 %v363
        %501 = vmatpush2.msra.mxu0 %v362
        %502 = vmatprep.subr.mxu0 %v361
        %503 = vmatpush2.msra.mxu0 %v360
        %504 = vmatprep.subr.mxu0 %v359
        %505 = vmatpush2.msra.mxu0 %v358
        %506 = vmatprep.subr.mxu0 %v357
        %507 = vmatpush2.msra.mxu0 %v356
        %508 = vmatprep.subr.mxu0 %v355
        %509 = vmatpush2.msra.mxu0 %v354
        %510 = vmatprep.subr.mxu0 %v353
        %511 = vmatpush2.msra.mxu0 %v352
        %512 = vmatprep.mubr.f32.mxu0 %v317
        %513 = vmatmul.mubr.f32.gmra.mxu0 %v316
        %v514 = vpop.f32.mrf.mxu0
        %v515 = vadd.f32 0.0, %v514
        %v516 = vpop.f32.mrf.mxu0
        %v517 = vadd.f32 0.0, %v516
        %518 = vdwg.mxu0
        %519 = vmatprep.subr.mxu0 %v415
        %520 = vmatpush1.msra.mxu0 %v414
        %521 = vmatprep.subr.mxu0 %v413
        %522 = vmatpush1.msra.mxu0 %v412
        %523 = vmatprep.subr.mxu0 %v411
        %524 = vmatpush1.msra.mxu0 %v410
        %525 = vmatprep.subr.mxu0 %v409
        %526 = vmatpush1.msra.mxu0 %v408
        %527 = vmatprep.subr.mxu0 %v407
        %528 = vmatpush1.msra.mxu0 %v406
        %529 = vmatprep.subr.mxu0 %v405
        %530 = vmatpush1.msra.mxu0 %v404
        %531 = vmatprep.subr.mxu0 %v403
        %532 = vmatpush1.msra.mxu0 %v402
        %533 = vmatprep.subr.mxu0 %v401
        %534 = vmatpush1.msra.mxu0 %v400
        %535 = vmatprep.subr.mxu0 %v399
        %536 = vmatpush1.msra.mxu0 %v398
        %537 = vmatprep.subr.mxu0 %v397
        %538 = vmatpush1.msra.mxu0 %v396
        %539 = vmatprep.subr.mxu0 %v395
        %540 = vmatpush1.msra.mxu0 %v394
        %541 = vmatprep.subr.mxu0 %v393
        %542 = vmatpush1.msra.mxu0 %v392
        %543 = vmatprep.subr.mxu0 %v391
        %544 = vmatpush1.msra.mxu0 %v390
        %545 = vmatprep.subr.mxu0 %v389
        %546 = vmatpush1.msra.mxu0 %v388
        %547 = vmatprep.subr.mxu0 %v387
        %548 = vmatpush1.msra.mxu0 %v386
        %549 = vmatprep.subr.mxu0 %v385
        %550 = vmatpush1.msra.mxu0 %v384
        %551 = vmatprep.subr.mxu0 %v447
        %552 = vmatpush2.msra.mxu0 %v446
        %553 = vmatprep.subr.mxu0 %v445
        %554 = vmatpush2.msra.mxu0 %v444
        %555 = vmatprep.subr.mxu0 %v443
        %556 = vmatpush2.msra.mxu0 %v442
        %557 = vmatprep.subr.mxu0 %v441
        %558 = vmatpush2.msra.mxu0 %v440
        %559 = vmatprep.subr.mxu0 %v439
        %560 = vmatpush2.msra.mxu0 %v438
        %561 = vmatprep.subr.mxu0 %v437
        %562 = vmatpush2.msra.mxu0 %v436
        %563 = vmatprep.subr.mxu0 %v435
        %564 = vmatpush2.msra.mxu0 %v434
        %565 = vmatprep.subr.mxu0 %v433
        %566 = vmatpush2.msra.mxu0 %v432
        %567 = vmatprep.subr.mxu0 %v431
        %568 = vmatpush2.msra.mxu0 %v430
        %569 = vmatprep.subr.mxu0 %v429
        %570 = vmatpush2.msra.mxu0 %v428
        %571 = vmatprep.subr.mxu0 %v427
        %572 = vmatpush2.msra.mxu0 %v426
        %573 = vmatprep.subr.mxu0 %v425
        %574 = vmatpush2.msra.mxu0 %v424
        %575 = vmatprep.subr.mxu0 %v423
        %576 = vmatpush2.msra.mxu0 %v422
        %577 = vmatprep.subr.mxu0 %v421
        %578 = vmatpush2.msra.mxu0 %v420
        %579 = vmatprep.subr.mxu0 %v419
        %580 = vmatpush2.msra.mxu0 %v418
        %581 = vmatprep.subr.mxu0 %v417
        %582 = vmatpush2.msra.mxu0 %v416
        %583 = vmatprep.mubr.f32.mxu0 %v319
        %584 = vmatmul.mubr.f32.gmra.mxu0 %v318
        %v585 = vpop.f32.mrf.mxu0
        %v586 = vadd.f32 %v515, %v585
        %v587 = vpop.f32.mrf.mxu0
        %v588 = vadd.f32 %v517, %v587
        %589 = vdwg.mxu0
        %v590 = vadd.f32 %v314, %v586
        %v591 = vadd.f32 %v315, %v588
        %592 = vst [vmem:[#allocation2] sm:$0xff] %v590
        %593 = vst [vmem:[#allocation2 + $0x8] sm:$0xff] %v591
        %p594 = scmp.eq.s32.totalorder %s25, 1
        // Predicated region
        $region53: #{rotnet_forward.1} parent=39 // pred_check
          %p595 = pneg %p594
        $region54: #{rotnet_forward.1} parent=39 // pred_check_branch
          %597 = sbr.rel (%p595) target = $region56
        $region55: #{rotnet_forward.1} parent=39 // pred_region
          %v598 = vld [vmem:[#allocation2] sm:$0xff]
          %v599 = vld [vmem:[#allocation2 + $0x8] sm:$0xff]
          %v600 = vld [vmem:[%s2] sm:$0x3]
          %v602 = vlaneseq
          %v603 = vshrl.u32 %v602, 7
          %v604 = vsub.s32 0, %v603
          %v605 = vrot.slane %v600, %v604
          %v606 = vlaneseq
          %v607 = vshrl.u32 %v606, 7
          %v608 = vsub.s32 1, %v607
          %v609 = vrot.slane %v600, %v608
          %v612 = vadd.f32 %v598, %v605
          %v613 = vadd.f32 %v599, %v609
          %v614 = vmax.f32 %v612, 0.0
          %v615 = vmax.f32 %v613, 0.0
          %v616 = vld [vmem:[#allocation5] sm:$0xff]
          %v617 = vld [vmem:[#allocation5 + $0x8] sm:$0xff]
          %v618 = vld [vmem:[#allocation5 + $0x10] sm:$0xff]
          %v619 = vld [vmem:[#allocation5 + $0x18] sm:$0xff]
          %v620 = vld [vmem:[#allocation5 + $0x20] sm:$0xff]
          %v621 = vld [vmem:[#allocation5 + $0x28] sm:$0xff]
          %v622 = vld [vmem:[#allocation5 + $0x30] sm:$0xff]
          %v623 = vld [vmem:[#allocation5 + $0x38] sm:$0xff]
          %v624 = vld [vmem:[#allocation5 + $0x40] sm:$0xff]
          %v625 = vld [vmem:[#allocation5 + $0x48] sm:$0xff]
          %v626 = vld [vmem:[#allocation5 + $0x50] sm:$0xff]
          %v627 = vld [vmem:[#allocation5 + $0x58] sm:$0xff]
          %v628 = vld [vmem:[#allocation5 + $0x60] sm:$0xff]
          %v629 = vld [vmem:[#allocation5 + $0x68] sm:$0xff]
          %v630 = vld [vmem:[#allocation5 + $0x70] sm:$0xff]
          %v631 = vld [vmem:[#allocation5 + $0x78] sm:$0xff]
          %v632 = vld [vmem:[#allocation5 + $0x80] sm:$0xff]
          %v633 = vld [vmem:[#allocation5 + $0x88] sm:$0xff]
          %v634 = vld [vmem:[#allocation5 + $0x90] sm:$0xff]
          %v635 = vld [vmem:[#allocation5 + $0x98] sm:$0xff]
          %v636 = vld [vmem:[#allocation5 + $0xa0] sm:$0xff]
          %v637 = vld [vmem:[#allocation5 + $0xa8] sm:$0xff]
          %v638 = vld [vmem:[#allocation5 + $0xb0] sm:$0xff]
          %v639 = vld [vmem:[#allocation5 + $0xb8] sm:$0xff]
          %v640 = vld [vmem:[#allocation5 + $0xc0] sm:$0xff]
          %v641 = vld [vmem:[#allocation5 + $0xc8] sm:$0xff]
          %v642 = vld [vmem:[#allocation5 + $0xd0] sm:$0xff]
          %v643 = vld [vmem:[#allocation5 + $0xd8] sm:$0xff]
          %v644 = vld [vmem:[#allocation5 + $0xe0] sm:$0xff]
          %v645 = vld [vmem:[#allocation5 + $0xe8] sm:$0xff]
          %v646 = vld [vmem:[#allocation5 + $0xf0] sm:$0xff]
          %v647 = vld [vmem:[#allocation5 + $0xf8] sm:$0xff]
          %v648 = vld [vmem:[%s4] sm:$0x1]
          %v650 = vlaneseq
          %v651 = vshrl.u32 %v650, 7
          %v652 = vsub.s32 0, %v651
          %v653 = vrot.slane %v648, %v652
          %655 = vmatprep.subr.mxu0 0.0
          %656 = vmatpush1.msra.mxu0 %v631
          %657 = vmatprep.subr.mxu0 0.0
          %658 = vmatpush1.msra.mxu0 %v630
          %659 = vmatprep.subr.mxu0 0.0
          %660 = vmatpush1.msra.mxu0 %v629
          %661 = vmatprep.subr.mxu0 0.0
          %662 = vmatpush1.msra.mxu0 %v628
          %663 = vmatprep.subr.mxu0 0.0
          %664 = vmatpush1.msra.mxu0 %v627
          %665 = vmatprep.subr.mxu0 0.0
          %666 = vmatpush1.msra.mxu0 %v626
          %667 = vmatprep.subr.mxu0 0.0
          %668 = vmatpush1.msra.mxu0 %v625
          %669 = vmatprep.subr.mxu0 0.0
          %670 = vmatpush1.msra.mxu0 %v624
          %671 = vmatprep.subr.mxu0 0.0
          %672 = vmatpush1.msra.mxu0 %v623
          %673 = vmatprep.subr.mxu0 0.0
          %674 = vmatpush1.msra.mxu0 %v622
          %675 = vmatprep.subr.mxu0 0.0
          %676 = vmatpush1.msra.mxu0 %v621
          %677 = vmatprep.subr.mxu0 0.0
          %678 = vmatpush1.msra.mxu0 %v620
          %679 = vmatprep.subr.mxu0 0.0
          %680 = vmatpush1.msra.mxu0 %v619
          %681 = vmatprep.subr.mxu0 0.0
          %682 = vmatpush1.msra.mxu0 %v618
          %683 = vmatprep.subr.mxu0 0.0
          %684 = vmatpush1.msra.mxu0 %v617
          %685 = vmatprep.subr.mxu0 0.0
          %686 = vmatpush1.msra.mxu0 %v616
          %687 = vmatprep.subr.mxu0 0.0
          %688 = vmatpush2.msra.mxu0 %v647
          %689 = vmatprep.subr.mxu0 0.0
          %690 = vmatpush2.msra.mxu0 %v646
          %691 = vmatprep.subr.mxu0 0.0
          %692 = vmatpush2.msra.mxu0 %v645
          %693 = vmatprep.subr.mxu0 0.0
          %694 = vmatpush2.msra.mxu0 %v644
          %695 = vmatprep.subr.mxu0 0.0
          %696 = vmatpush2.msra.mxu0 %v643
          %697 = vmatprep.subr.mxu0 0.0
          %698 = vmatpush2.msra.mxu0 %v642
          %699 = vmatprep.subr.mxu0 0.0
          %700 = vmatpush2.msra.mxu0 %v641
          %701 = vmatprep.subr.mxu0 0.0
          %702 = vmatpush2.msra.mxu0 %v640
          %703 = vmatprep.subr.mxu0 0.0
          %704 = vmatpush2.msra.mxu0 %v639
          %705 = vmatprep.subr.mxu0 0.0
          %706 = vmatpush2.msra.mxu0 %v638
          %707 = vmatprep.subr.mxu0 0.0
          %708 = vmatpush2.msra.mxu0 %v637
          %709 = vmatprep.subr.mxu0 0.0
          %710 = vmatpush2.msra.mxu0 %v636
          %711 = vmatprep.subr.mxu0 0.0
          %712 = vmatpush2.msra.mxu0 %v635
          %713 = vmatprep.subr.mxu0 0.0
          %714 = vmatpush2.msra.mxu0 %v634
          %715 = vmatprep.subr.mxu0 0.0
          %716 = vmatpush2.msra.mxu0 %v633
          %717 = vmatprep.subr.mxu0 0.0
          %718 = vmatpush2.msra.mxu0 %v632
          %719 = vmatprep.mubr.f32.mxu0 %v615
          %720 = vmatmul.mubr.f32.gmra.mxu0 %v614
          %v721 = vpop.f32.mrf.mxu0
          %v722 = vadd.f32 %v653, %v721
          %v723 = vpop.f32.mrf.mxu0
          %724 = vdwg.mxu0
          %725 = vst [vmem:[%s307] sm:$0xff] %v722
        $region56: #{rotnet_forward.1} parent=39 // pred_fallthru
          _
        %p726 = scmp.lt.s32.totalorder %s24, 0
        %s727 = scalar_select %p726, %s24, 0
        %s728 = smul.addr %s727, 8
        %s729 = scalar_lea.vmem %s5, %s728
        // Predicated region
        $region57: #{rotnet_forward.1} parent=39 // pred_check
          %p730 = pneg %p167
        $region58: #{rotnet_forward.1} parent=39 // pred_check_branch
          %732 = sbr.rel (%p730) target = $region60
        $region59: #{rotnet_forward.1} parent=39 // pred_region
          _
        $region60: #{rotnet_forward.1} parent=39 // pred_fallthru
          _
        // Predicated region
        $region61: #{rotnet_forward.1} parent=39 // pred_check
          %p733 = pneg %p167
        $region62: #{rotnet_forward.1} parent=39 // pred_check_branch
          %735 = sbr.rel (%p733) target = $region64
        $region63: #{rotnet_forward.1} parent=39 // pred_region
          %p736 = scmp.lt.s32.totalorder %s24, 0
          %s737 = scalar_select %p736, %s24, 0
          %s738 = smul.addr %s737, 8
          %s739 = scalar_lea.vmem %s5, %s738
        $region64: #{rotnet_forward.1} parent=39 // pred_fallthru
          _
      $region40: #{rotnet_forward.1} parent=5 // pred_fallthru
        _
      %p740 = scmp.le.s32.totalorder 2, %s15
      // Predicated region
      $region65: #{rotnet_forward.1} parent=5 // pred_check
        %p741 = pneg %p740
      $region66: #{rotnet_forward.1} parent=5 // pred_check_branch
        %743 = sbr.rel (%p741) target = $region68
      $region67: #{rotnet_forward.1} parent=5 // pred_region
        %s744 = ssub.s32 %s15, 2
      $region68: #{rotnet_forward.1} parent=5 // pred_fallthru
        _
    $region6: #{rotnet_forward.1} parent=1 // loop_footer
      %s19 = sadd.s32 1, %s15
    $region7: #{rotnet_forward.1} parent=1 // loop_footer_branch
      %14 = sbr.rel target = $region3
    $region8: #{rotnet_forward.1} parent=1 // loop_exit
      _
    %745 = vsyncpa [#allocation4], 1
    %s746 = scalar_lea.sflag [#allocation4], 1
    %747 = vsyncpa %s746, 1
    %748 = vsyncpa [#allocation6], 1

</llo_original>
